<compile_context>
chip_gen: v7x
topology: tpu7x:2x2x1
jax: 0.10.0
libtpu: 0.0.40
codegen_flags: <defaults>
</compile_context>

<pallas_src>
import functools

import jax
import jax.numpy as jnp
from jax.experimental import pallas as pl
from jax.experimental.pallas import tpu as pltpu


def _round_up(x, m):
    return ((x + m - 1) // m) * m


def _dbn_fused_kernel(v_ref, w_ref, b_ref, o_ref, act_ref):
    # v_ref   : (TB, P)      padded input activations for this batch tile
    # w_ref   : (1, P, P)    this layer's pre-transposed, zero-padded weights
    # b_ref   : (1, 1, P)    this layer's zero-padded hidden bias
    # o_ref   : (TB, P)      padded final activations (written on last layer)
    # act_ref : (TB, P)      VMEM scratch carrying the activation across layers
    layer = pl.program_id(1)

    @pl.when(layer == 0)
    def _():
        act_ref[...] = v_ref[...]

    z = jnp.dot(act_ref[...], w_ref[0], preferred_element_type=jnp.float32)
    z = z + b_ref[0]                      # (1, P) broadcasts over batch rows
    act_ref[...] = jax.nn.sigmoid(z)      # EUP exp + VPU, exact f32

    @pl.when(layer == pl.num_programs(1) - 1)
    def _():
        o_ref[...] = act_ref[...]


@functools.partial(jax.jit, static_argnums=(3,))
def dbn_forward_fused(v, w_packed, b_packed, out_size):
    """Fused DBN forward: all RBM prop_forward layers in one pallas_call."""
    B, in_size = v.shape
    L, P, _ = w_packed.shape

    # Batch tile: vreg-aligned, capped so (TB, P) activations + scratch stay
    # comfortably inside VMEM even for wide stacks.
    TB = min(_round_up(B, 8), 256)
    B_pad = _round_up(B, TB)

    # Zero-pad the visible units once (sublane-pad batch, lane-pad features).
    v_pad = jnp.zeros((B_pad, P), jnp.float32).at[:B, :in_size].set(
        v.astype(jnp.float32))

    out_pad = pl.pallas_call(
        _dbn_fused_kernel,
        out_shape=jax.ShapeDtypeStruct((B_pad, P), jnp.float32),
        grid_spec=pltpu.PrefetchScalarGridSpec(
            num_scalar_prefetch=0,
            grid=(B_pad // TB, L),
            in_specs=[
                # Input acts: block index depends only on the batch tile, so it
                # is fetched once per tile, not once per layer.
                pl.BlockSpec((TB, P), lambda b, l: (b, 0)),
                pl.BlockSpec((1, P, P), lambda b, l: (l, 0, 0)),   # weights
                pl.BlockSpec((1, 1, P), lambda b, l: (l, 0, 0)),   # bias
            ],
            out_specs=pl.BlockSpec((TB, P), lambda b, l: (b, 0)),
            scratch_shapes=[pltpu.VMEM((TB, P), jnp.float32)],
        ),
        compiler_params=pltpu.CompilerParams(
            # Batch tiles are independent (megacore-shardable); layers carry a
            # dependency through the VMEM scratch -> sequential.
            dimension_semantics=("parallel", "arbitrary")),
    )(v_pad, w_packed, b_packed)

    return out_pad[:B, :out_size]


class DBN:
    """JAX/Pallas mirror of the PyTorch DBN: a stack of RBM prop_forward layers."""

    def __init__(self, input_size, output_sizes, key):
        self.input_size = int(input_size)
        self.output_sizes = list(output_sizes)
        self.params = []                    # unpacked (W (out,in), h_bias (out,))
        in_sz = input_size
        for out_sz in self.output_sizes:
            key, wk = jax.random.split(key)
            # Deterministic synthetic init (RBM.__init__ shapes: W (out,in), h_bias (out,))
            w = 0.1 * jax.random.normal(wk, (out_sz, in_sz), dtype=jnp.float32)
            h_bias = jnp.zeros((out_sz,), dtype=jnp.float32)
            self.params.append((w, h_bias))
            in_sz = out_sz

        # Pack ONCE: pre-transposed (In, Out), zero-padded to a lane-dense P.
        P = _round_up(max([self.input_size] + self.output_sizes), 128)
        L = len(self.output_sizes)
        w_packed = jnp.zeros((L, P, P), jnp.float32)
        b_packed = jnp.zeros((L, 1, P), jnp.float32)
        in_sz = self.input_size
        for l, (w, b) in enumerate(self.params):
            out_sz = w.shape[0]
            w_packed = w_packed.at[l, :in_sz, :out_sz].set(w.T)
            b_packed = b_packed.at[l, 0, :out_sz].set(b)
            in_sz = out_sz
        self.w_packed = w_packed
        self.b_packed = b_packed
        self.padded_width = P

    def forward(self, v):
        return dbn_forward_fused(v, self.w_packed, self.b_packed,
                                 self.output_sizes[-1])


def _reference_forward(v, params):
    for (w, h_bias) in params:
        v = jax.nn.sigmoid(v @ w.T + h_bias)
    return v


# TODO(synk): RBM training machinery (k-step contrastive divergence / Gibbs
# sampling, Adam, DataLoader) is not part of DBN.forward and is not translated.

if __name__ == "__main__":
    key = jax.random.PRNGKey(0)
    key, vk = jax.random.split(key)

    batch = 8
    input_size = 32
    output_sizes = [64, 48, 16]

    v = jax.random.normal(vk, (batch, input_size), dtype=jnp.float32)

    dbn = DBN(input_size, output_sizes, key)
    out = dbn.forward(v)
    out = jax.block_until_ready(out)

    ref = _reference_forward(v, dbn.params)
    assert out.shape == (batch, output_sizes[-1])
    assert jnp.allclose(out, ref, atol=1e-5, rtol=1e-5)

    print("KERNEL_OK")
</pallas_src>

<mosaic_0001>
module attributes {stable_mosaic.version = 11 : i64} {
  func.func @_dbn_fused_kernel(%arg0: i32, %arg1: i32, %arg2: memref<8x128xf32, #tpu.memory_space<vmem>>, %arg3: memref<1x128x128xf32, #tpu.memory_space<vmem>>, %arg4: memref<1x1x128xf32, #tpu.memory_space<vmem>>, %arg5: memref<8x128xf32, #tpu.memory_space<vmem>>, %arg6: memref<8x128xf32, #tpu.memory_space<vmem>>) attributes {dimension_semantics = [#tpu.dimension_semantics<parallel>, #tpu.dimension_semantics<arbitrary>], iteration_bounds = array<i64: 1, 3>, scalar_prefetch = 0 : i64, scratch_operands = 1 : i64, tpu.core_type = #tpu.core_type<tc>, window_params = [{transform_indices = @transform_0, window_bounds = array<i64: 8, 128>}, {transform_indices = @transform_1, window_bounds = array<i64: 1, 128, 128>}, {transform_indices = @transform_2, window_bounds = array<i64: 1, 1, 128>}, {transform_indices = @transform_3, window_bounds = array<i64: 8, 128>}]} {
    %c0_i32 = arith.constant 0 : i32
    %0 = arith.cmpi eq, %arg1, %c0_i32 : i32
    %1 = arith.extui %0 : i1 to i32
    %c0_i32_0 = arith.constant 0 : i32
    %2 = arith.cmpi ne, %1, %c0_i32_0 : i32
    scf.if %2 {
      %c0_12 = arith.constant 0 : index
      %c0_13 = arith.constant 0 : index
      %20 = vector.load %arg2[%c0_12, %c0_13] : memref<8x128xf32, #tpu.memory_space<vmem>>, vector<8x128xf32>
      %c0_14 = arith.constant 0 : index
      %c0_15 = arith.constant 0 : index
      %21 = vector.load %arg6[%c0_14, %c0_15] : memref<8x128xf32, #tpu.memory_space<vmem>>, vector<8x128xf32>
      tpu.vector_store %arg6[%c0_14, %c0_15], %20 {strides = array<i32>} : memref<8x128xf32, #tpu.memory_space<vmem>>, vector<8x128xf32>,
    } else {
    }
    %c0 = arith.constant 0 : index
    %c0_1 = arith.constant 0 : index
    %3 = vector.load %arg6[%c0, %c0_1] : memref<8x128xf32, #tpu.memory_space<vmem>>, vector<8x128xf32>
    %c0_2 = arith.constant 0 : index
    %c0_3 = arith.constant 0 : index
    %c0_4 = arith.constant 0 : index
    %4 = vector.load %arg3[%c0_2, %c0_3, %c0_4] : memref<1x128x128xf32, #tpu.memory_space<vmem>>, vector<1x128x128xf32>
    %5 = vector.shape_cast %4 : vector<1x128x128xf32> to vector<128x128xf32>
    %cst = arith.constant dense<0.000000e+00> : vector<8x128xf32>
    %6 = tpu.matmul %3, %5, %cst {dimension_numbers = #tpu.dot_dimension_numbers<[1], [0], [0], [1], [0, 0, 1, 1], [], []>} : vector<8x128xf32>, vector<128x128xf32>, vector<8x128xf32> -> vector<8x128xf32>
    %c0_5 = arith.constant 0 : index
    %c0_6 = arith.constant 0 : index
    %c0_7 = arith.constant 0 : index
    %7 = vector.load %arg4[%c0_5, %c0_6, %c0_7] : memref<1x1x128xf32, #tpu.memory_space<vmem>>, vector<1x1x128xf32>
    %8 = vector.shape_cast %7 : vector<1x1x128xf32> to vector<1x128xf32>
    %9 = vector.broadcast %8 : vector<1x128xf32> to vector<8x128xf32>
    %10 = arith.addf %6, %9 : vector<8x128xf32>
    %11 = arith.negf %10 : vector<8x128xf32>
    %12 = math.exp %11 : vector<8x128xf32>
    %cst_8 = arith.constant 1.000000e+00 : f32
    %13 = vector.broadcast %cst_8 : f32 to vector<8x128xf32>
    %14 = arith.addf %13, %12 : vector<8x128xf32>
    %15 = arith.divf %13, %14 : vector<8x128xf32>
    %c0_9 = arith.constant 0 : index
    %c0_10 = arith.constant 0 : index
    %16 = vector.load %arg6[%c0_9, %c0_10] : memref<8x128xf32, #tpu.memory_space<vmem>>, vector<8x128xf32>
    tpu.vector_store %arg6[%c0_9, %c0_10], %15 {strides = array<i32>} : memref<8x128xf32, #tpu.memory_space<vmem>>, vector<8x128xf32>,
    %c2_i32 = arith.constant 2 : i32
    %17 = arith.cmpi eq, %arg1, %c2_i32 : i32
    %18 = arith.extui %17 : i1 to i32
    %c0_i32_11 = arith.constant 0 : i32
    %19 = arith.cmpi ne, %18, %c0_i32_11 : i32
    scf.if %19 {
      %c0_12 = arith.constant 0 : index
      %c0_13 = arith.constant 0 : index
      %20 = vector.load %arg6[%c0_12, %c0_13] : memref<8x128xf32, #tpu.memory_space<vmem>>, vector<8x128xf32>
      %c0_14 = arith.constant 0 : index
      %c0_15 = arith.constant 0 : index
      %21 = vector.load %arg5[%c0_14, %c0_15] : memref<8x128xf32, #tpu.memory_space<vmem>>, vector<8x128xf32>
      tpu.vector_store %arg5[%c0_14, %c0_15], %20 {strides = array<i32>} : memref<8x128xf32, #tpu.memory_space<vmem>>, vector<8x128xf32>,
    } else {
    }
    return
  }
  func.func @transform_0(%arg0: i32, %arg1: i32) -> (i32, i32) {
    %c0_i32 = arith.constant 0 : i32
    %c0_i32_0 = arith.constant 0 : i32
    return %arg0, %c0_i32 : i32, i32
  }
  func.func @transform_1(%arg0: i32, %arg1: i32) -> (i32, i32, i32) {
    %c0_i32 = arith.constant 0 : i32
    %c0_i32_0 = arith.constant 0 : i32
    %c0_i32_1 = arith.constant 0 : i32
    return %arg1, %c0_i32, %c0_i32_0 : i32, i32, i32
  }
  func.func @transform_2(%arg0: i32, %arg1: i32) -> (i32, i32, i32) {
    %c0_i32 = arith.constant 0 : i32
    %c0_i32_0 = arith.constant 0 : i32
    %c0_i32_1 = arith.constant 0 : i32
    return %arg1, %c0_i32, %c0_i32_0 : i32, i32, i32
  }
  func.func @transform_3(%arg0: i32, %arg1: i32) -> (i32, i32) {
    %c0_i32 = arith.constant 0 : i32
    %c0_i32_0 = arith.constant 0 : i32
    return %arg0, %c0_i32 : i32, i32
  }
}

</mosaic_0001>

<llo_original>
// kernel: dbn_forward_fused.1
$region0: #{dbn_forward_fused.1}
  #allocation0 [shape = 'u32[]', space=smem, size = 0x4, offset = 0x4, fixed_abs, tag = 'smem constant byte address 0x4 - core index']
  #allocation1 [shape = 'u32[144,128]{1,0:T(1,128)}', space=vmem, size = 0x12000, scoped, tag = 'internal scratch']
  #allocation2 [shape = 'f32[8,128]{1,0:T(8,128)}', space=vmem, size = 0x1000, scoped, tag = 'scratch operand']
  %s0 = inlined_call_operand.vmem [shape: f32[8,128], index: 0, kind: input, shape index: {}]
  %s1 = inlined_call_operand.hbm [shape: f32[3,128,128], index: 1, kind: input, shape index: {}]
  %s2 = inlined_call_operand.vmem [shape: f32[3,1,128], index: 2, kind: input, shape index: {}]
  %s3 = inlined_call_operand.hbm [shape: f32[8,128], index: 3, kind: output, shape index: {}]
  %s4 = sld [smem:[#allocation0]]
  $region57: #{dbn_forward_fused.1} parent=0
    _
  %s6 = ssub.s32 1, %s4
  %s7 = scalar_select 0, %s6, %s4
  $region1: #{dbn_forward_fused.1} parent=0
    #allocation3 [shape = 'u8[131072]{0}', space=vmem, size = 0x20000, scoped, tag = 'input window, operand 1']
    #allocation4 [shape = 's32[2]{0}', space=sflag, size = 0x8, scoped, tag = 'scoped memory for dbn_forward_fused.1']
    #allocation5 [shape = 's32[2]{0}', space=sflag, size = 0x8, scoped, tag = 'scoped memory for dbn_forward_fused.1']
    #allocation6 [shape = 'u8[4096]{0}', space=vmem, size = 0x1000, scoped, tag = 'output window, operand 0, single buffered']
    %8 = vsyncpa [#allocation4], 0
    %s9 = scalar_lea.sflag [#allocation4], 1
    %10 = vsyncpa %s9, 0
    %11 = vsyncpa [#allocation5], 0
    loop: start=0, step=1, limit=5
    $region2: #{dbn_forward_fused.1} parent=1 // loop_pre_header
      _
    $region3: #{dbn_forward_fused.1} parent=1 // loop_header
      %s13 = sphi 0, %s17
      %p14 = scmp.ge.s32.totalorder %s13, 5
      %s20 = sphi 0, %s32
      %s21 = sphi 0, %s28
      %s22 = sphi 0, %s20
      %s23 = sphi 0, %s21
      %s24 = sphi 0, %s22
      %s25 = sphi 0, %s23
      %s35 = sphi 0, %s37
      %s38 = sphi 0, %s35
      %s39 = sphi 0, %s38
      %s55 = sphi 0, %s39
      %s61 = sphi 0, %s63
      %s64 = sphi 0, %s61
      %s65 = sphi 0, %s64
      %s81 = sphi 0, %s65
      %s87 = sphi 0, %s89
      %s90 = sphi 0, %s87
      %s91 = sphi 0, %s90
      %s107 = sphi 0, %s91
      %s113 = sphi 0, %s115
      %s116 = sphi 0, %s113
      %s117 = sphi 0, %s116
      %s133 = sphi 0, %s117
    $region4: #{dbn_forward_fused.1} parent=1 // loop_header_branch
      %16 = sbr.rel (%p14) target = $region8
    $region5: #{dbn_forward_fused.1} parent=1 // loop_body
      %s18 = ssub.s32 %s13, 1
      %s19 = ssub.s32 %s13, 2
      %s26 = sadd.s32 1, %s21
      %p27 = scmp.ge.s32.totalorder %s26, 3
      %s28 = scalar_select %p27, 0, %s26
      %s29 = sadd.s32 1, %s20
      %s30 = scalar_select %p27, %s29, %s20
      %p31 = scmp.ge.s32.totalorder %s30, 1
      %s32 = scalar_select %p31, 0, %s30
      %s33 = ssub.s32 %s20, %s32
      %p34 = scmp.eq.s32.totalorder %s33, 0
      %s36 = sadd.s32 %s35, 1
      %s37 = scalar_select %p34, %s35, %s36
      %p40 = pneg %p34
      %p41 = scmp.eq.s32.totalorder %s13, 2
      %p42 = por %p40, %p41
      %p43 = scmp.ne.s32.totalorder %s35, %s38
      %p44 = scmp.eq.s32.totalorder %s13, 0
      %p45 = por %p43, %p44
      %p46 = scmp.ne.s32.totalorder %s35, %s38
      %p47 = scmp.eq.s32.totalorder %s18, 2
      %p48 = por %p46, %p47
      %p49 = scmp.ne.s32.totalorder %s38, %s39
      %p50 = scmp.eq.s32.totalorder %s18, 0
      %p51 = por %p49, %p50
      %p52 = scmp.ne.s32.totalorder %s38, %s39
      %p53 = scmp.eq.s32.totalorder %s19, 2
      %p54 = por %p52, %p53
      %p56 = scmp.ne.s32.totalorder %s39, %s55
      %p57 = scmp.eq.s32.totalorder %s19, 0
      %p58 = por %p56, %p57
      %s59 = ssub.s32 %s21, %s28
      %p60 = scmp.eq.s32.totalorder %s59, 0
      %s62 = sadd.s32 %s61, 1
      %s63 = scalar_select %p60, %s61, %s62
      %p66 = pneg %p60
      %p67 = scmp.eq.s32.totalorder %s13, 2
      %p68 = por %p66, %p67
      %p69 = scmp.ne.s32.totalorder %s61, %s64
      %p70 = scmp.eq.s32.totalorder %s13, 0
      %p71 = por %p69, %p70
      %p72 = scmp.ne.s32.totalorder %s61, %s64
      %p73 = scmp.eq.s32.totalorder %s18, 2
      %p74 = por %p72, %p73
      %p75 = scmp.ne.s32.totalorder %s64, %s65
      %p76 = scmp.eq.s32.totalorder %s18, 0
      %p77 = por %p75, %p76
      %p78 = scmp.ne.s32.totalorder %s64, %s65
      %p79 = scmp.eq.s32.totalorder %s19, 2
      %p80 = por %p78, %p79
      %p82 = scmp.ne.s32.totalorder %s65, %s81
      %p83 = scmp.eq.s32.totalorder %s19, 0
      %p84 = por %p82, %p83
      %s85 = ssub.s32 %s21, %s28
      %p86 = scmp.eq.s32.totalorder %s85, 0
      %s88 = sadd.s32 %s87, 1
      %s89 = scalar_select %p86, %s87, %s88
      %p92 = pneg %p86
      %p93 = scmp.eq.s32.totalorder %s13, 2
      %p94 = por %p92, %p93
      %p95 = scmp.ne.s32.totalorder %s87, %s90
      %p96 = scmp.eq.s32.totalorder %s13, 0
      %p97 = por %p95, %p96
      %p98 = scmp.ne.s32.totalorder %s87, %s90
      %p99 = scmp.eq.s32.totalorder %s18, 2
      %p100 = por %p98, %p99
      %p101 = scmp.ne.s32.totalorder %s90, %s91
      %p102 = scmp.eq.s32.totalorder %s18, 0
      %p103 = por %p101, %p102
      %p104 = scmp.ne.s32.totalorder %s90, %s91
      %p105 = scmp.eq.s32.totalorder %s19, 2
      %p106 = por %p104, %p105
      %p108 = scmp.ne.s32.totalorder %s91, %s107
      %p109 = scmp.eq.s32.totalorder %s19, 0
      %p110 = por %p108, %p109
      %s111 = ssub.s32 %s20, %s32
      %p112 = scmp.eq.s32.totalorder %s111, 0
      %s114 = sadd.s32 %s113, 1
      %s115 = scalar_select %p112, %s113, %s114
      %p118 = pneg %p112
      %p119 = scmp.eq.s32.totalorder %s13, 2
      %p120 = por %p118, %p119
      %p121 = scmp.ne.s32.totalorder %s113, %s116
      %p122 = scmp.eq.s32.totalorder %s13, 0
      %p123 = por %p121, %p122
      %p124 = scmp.ne.s32.totalorder %s113, %s116
      %p125 = scmp.eq.s32.totalorder %s18, 2
      %p126 = por %p124, %p125
      %p127 = scmp.ne.s32.totalorder %s116, %s117
      %p128 = scmp.eq.s32.totalorder %s18, 0
      %p129 = por %p127, %p128
      %p130 = scmp.ne.s32.totalorder %s116, %s117
      %p131 = scmp.eq.s32.totalorder %s19, 2
      %p132 = por %p130, %p131
      %p134 = scmp.ne.s32.totalorder %s117, %s133
      %p135 = scmp.eq.s32.totalorder %s19, 0
      %p136 = por %p134, %p135
      %p137 = scmp.le.s32.totalorder 1, %s13
      %p138 = scmp.lt.s32.totalorder %s13, 4
      %p139 = pnand %p137, %p138
      %p140 = pneg %p139
      // Predicated region
      $region9: #{dbn_forward_fused.1} parent=5 // pred_check
        _
      $region10: #{dbn_forward_fused.1} parent=5 // pred_check_branch
        %142 = sbr.rel (%p139) target = $region12
      $region11: #{dbn_forward_fused.1} parent=5 // pred_region
        %s143 = ssub.s32 %s13, 1
        // Predicated region
        $region13: #{dbn_forward_fused.1} parent=11 // pred_check
          %p144 = pneg %p51
        $region14: #{dbn_forward_fused.1} parent=11 // pred_check_branch
          %146 = sbr.rel (%p144) target = $region16
        $region15: #{dbn_forward_fused.1} parent=11 // pred_region
          %p147 = scmp.lt.s32.totalorder %s22, 0
          %s148 = scalar_select %p147, %s22, 0
          %s149 = smul.addr %s148, 8
          %s150 = scalar_lea.vmem %s0, %s149
        $region16: #{dbn_forward_fused.1} parent=11 // pred_fallthru
          _
      $region12: #{dbn_forward_fused.1} parent=5 // pred_fallthru
        _
      %p151 = scmp.lt.s32.totalorder %s13, 3
      // Predicated region
      $region17: #{dbn_forward_fused.1} parent=5 // pred_check
        %p152 = pneg %p151
      $region18: #{dbn_forward_fused.1} parent=5 // pred_check_branch
        %154 = sbr.rel (%p152) target = $region20
      $region19: #{dbn_forward_fused.1} parent=5 // pred_region
        // Predicated region
        $region21: #{dbn_forward_fused.1} parent=19 // pred_check
          %p155 = pneg %p71
        $region22: #{dbn_forward_fused.1} parent=19 // pred_check_branch
          %157 = sbr.rel (%p155) target = $region24
        $region23: #{dbn_forward_fused.1} parent=19 // pred_region
          %s158 = sand.u32 %s61, 1
          %s159 = scalar_lea.sflag [#allocation4], %s158
          %s160 = sand.u32 %s61, 1
          %s161 = smul.addr %s160, 128
          %s162 = scalar_lea.vmem [#allocation3], %s161
          %s164 = ssub.s32 2048, 2048
          %165 = vsyncadd %s159, %s164
          %s166 = smul.addr %s21, 16
          %s167 = smul.addr %s166, 128
          %s168 = scalar_lea.hbm %s1, %s167
          %s169 = sshll.u32 %s162, 4
          %s170 = int_to_ptr.vmem [resolvable:$true] %s169
          %175 = dma.hbm_to_vmem [thread:$0]  %s168, 2048, %s170, %s159, 128, 128, 8
        $region24: #{dbn_forward_fused.1} parent=19 // pred_fallthru
          _
        // Predicated region
        $region25: #{dbn_forward_fused.1} parent=19 // pred_check
          %p176 = pneg %p97
        $region26: #{dbn_forward_fused.1} parent=19 // pred_check_branch
          %178 = sbr.rel (%p176) target = $region28
        $region27: #{dbn_forward_fused.1} parent=19 // pred_region
          %p179 = scmp.lt.s32.totalorder %s21, 2
          %s180 = scalar_select %p179, %s21, 2
          %s181 = scalar_lea.vmem %s2, %s180
        $region28: #{dbn_forward_fused.1} parent=19 // pred_fallthru
          _
      $region20: #{dbn_forward_fused.1} parent=5 // pred_fallthru
        _
      %p182 = scmp.le.s32.totalorder 1, %s13
      %p183 = scmp.lt.s32.totalorder %s13, 4
      %p184 = pnand %p182, %p183
      %p185 = pneg %p184
      // Predicated region
      $region29: #{dbn_forward_fused.1} parent=5 // pred_check
        _
      $region30: #{dbn_forward_fused.1} parent=5 // pred_check_branch
        %187 = sbr.rel (%p184) target = $region32
      $region31: #{dbn_forward_fused.1} parent=5 // pred_region
        %s188 = ssub.s32 %s13, 1
        %s189 = sand.u32 %s64, 1
        %s190 = scalar_lea.sflag [#allocation4], %s189
        %s191 = sand.u32 %s64, 1
        %s192 = smul.addr %s191, 128
        %s193 = scalar_lea.vmem [#allocation3], %s192
        // Predicated region
        $region33: #{dbn_forward_fused.1} parent=31 // pred_check
          %p194 = pneg %p77
        $region34: #{dbn_forward_fused.1} parent=31 // pred_check_branch
          %196 = sbr.rel (%p194) target = $region36
        $region35: #{dbn_forward_fused.1} parent=31 // pred_region
          %197 = dma.done %s190, 2048
        $region36: #{dbn_forward_fused.1} parent=31 // pred_fallthru
          _
        %p198 = scmp.lt.s32.totalorder %s22, 0
        %s199 = scalar_select %p198, %s22, 0
        %s200 = smul.addr %s199, 8
        %s201 = scalar_lea.vmem %s0, %s200
        %p202 = pneg %p51
        %p203 = pneg %p48
        %s204 = sand.u32 %s64, 1
        %s205 = scalar_lea.sflag [#allocation4], %s204
        %s206 = sand.u32 %s64, 1
        %s207 = smul.addr %s206, 128
        %s208 = scalar_lea.vmem [#allocation3], %s207
        %p209 = pneg %p77
        %p210 = pneg %p74
        %p211 = scmp.lt.s32.totalorder %s23, 2
        %s212 = scalar_select %p211, %s23, 2
        %s213 = scalar_lea.vmem %s2, %s212
        %p214 = pneg %p103
        %p215 = pneg %p100
        %p216 = pneg %p129
        %p217 = pneg %p126
        %p218 = scmp.lt.s32.totalorder %s22, 0
        %s219 = scalar_select %p218, %s22, 0
        %s220 = smul.addr %s219, 8
        %s221 = scalar_lea.vmem %s0, %s220
        %p222 = scmp.lt.s32.totalorder %s23, 2
        %s223 = scalar_select %p222, %s23, 2
        %s224 = scalar_lea.vmem %s2, %s223
        %p225 = scmp.eq.s32.totalorder %s23, 0
        // Predicated region
        $region37: #{dbn_forward_fused.1} parent=31 // pred_check
          %p226 = pneg %p225
        $region38: #{dbn_forward_fused.1} parent=31 // pred_check_branch
          %228 = sbr.rel (%p226) target = $region40
        $region39: #{dbn_forward_fused.1} parent=31 // pred_region
          %v229 = vld [vmem:[%s221] sm:$0xff]
          %230 = vst [vmem:[#allocation2] sm:$0xff] %v229
        $region40: #{dbn_forward_fused.1} parent=31 // pred_fallthru
          _
        %v231 = vld [vmem:[#allocation2] sm:$0xff]
        %v232 = vld [vmem:[%s193] sm:$0xff]
        %v233 = vld [vmem:[%s193 + $0x8] sm:$0xff]
        %v234 = vld [vmem:[%s193 + $0x10] sm:$0xff]
        %v235 = vld [vmem:[%s193 + $0x18] sm:$0xff]
        %v236 = vld [vmem:[%s193 + $0x20] sm:$0xff]
        %v237 = vld [vmem:[%s193 + $0x28] sm:$0xff]
        %v238 = vld [vmem:[%s193 + $0x30] sm:$0xff]
        %v239 = vld [vmem:[%s193 + $0x38] sm:$0xff]
        %v240 = vld [vmem:[%s193 + $0x40] sm:$0xff]
        %v241 = vld [vmem:[%s193 + $0x48] sm:$0xff]
        %v242 = vld [vmem:[%s193 + $0x50] sm:$0xff]
        %v243 = vld [vmem:[%s193 + $0x58] sm:$0xff]
        %v244 = vld [vmem:[%s193 + $0x60] sm:$0xff]
        %v245 = vld [vmem:[%s193 + $0x68] sm:$0xff]
        %v246 = vld [vmem:[%s193 + $0x70] sm:$0xff]
        %v247 = vld [vmem:[%s193 + $0x78] sm:$0xff]
        %v248 = vld [vmem:[%s224] sm:$0x1]
        %v250 = vlaneseq
        %v251 = vshrl.u32 %v250, 7
        %v252 = vsub.s32 0, %v251
        %v253 = vrot.slane %v248, %v252
        %255 = vmatprep.subr.mxu0 0.0
        %256 = vmatpush1.msra.mxu0 %v232
        %257 = vmatprep.subr.mxu0 0.0
        %258 = vmatpush1.msra.mxu0 %v233
        %259 = vmatprep.subr.mxu0 0.0
        %260 = vmatpush1.msra.mxu0 %v234
        %261 = vmatprep.subr.mxu0 0.0
        %262 = vmatpush1.msra.mxu0 %v235
        %263 = vmatprep.subr.mxu0 0.0
        %264 = vmatpush1.msra.mxu0 %v236
        %265 = vmatprep.subr.mxu0 0.0
        %266 = vmatpush1.msra.mxu0 %v237
        %267 = vmatprep.subr.mxu0 0.0
        %268 = vmatpush1.msra.mxu0 %v238
        %269 = vmatprep.subr.mxu0 0.0
        %270 = vmatpush1.msra.mxu0 %v239
        %271 = vmatprep.subr.mxu0 0.0
        %272 = vmatpush1.msra.mxu0 %v240
        %273 = vmatprep.subr.mxu0 0.0
        %274 = vmatpush1.msra.mxu0 %v241
        %275 = vmatprep.subr.mxu0 0.0
        %276 = vmatpush1.msra.mxu0 %v242
        %277 = vmatprep.subr.mxu0 0.0
        %278 = vmatpush1.msra.mxu0 %v243
        %279 = vmatprep.subr.mxu0 0.0
        %280 = vmatpush1.msra.mxu0 %v244
        %281 = vmatprep.subr.mxu0 0.0
        %282 = vmatpush1.msra.mxu0 %v245
        %283 = vmatprep.subr.mxu0 0.0
        %284 = vmatpush1.msra.mxu0 %v246
        %285 = vmatprep.subr.mxu0 0.0
        %286 = vmatpush1.msra.mxu0 %v247
        %287 = vmatprep.subr.mxu0 0.0
        %288 = vmatpush1.msra.mxu0 0.0
        %289 = vmatprep.subr.mxu0 0.0
        %290 = vmatpush1.msra.mxu0 0.0
        %291 = vmatprep.subr.mxu0 0.0
        %292 = vmatpush1.msra.mxu0 0.0
        %293 = vmatprep.subr.mxu0 0.0
        %294 = vmatpush1.msra.mxu0 0.0
        %295 = vmatprep.subr.mxu0 0.0
        %296 = vmatpush1.msra.mxu0 0.0
        %297 = vmatprep.subr.mxu0 0.0
        %298 = vmatpush1.msra.mxu0 0.0
        %299 = vmatprep.subr.mxu0 0.0
        %300 = vmatpush1.msra.mxu0 0.0
        %301 = vmatprep.subr.mxu0 0.0
        %302 = vmatpush1.msra.mxu0 0.0
        %303 = vmatprep.subr.mxu0 0.0
        %304 = vmatpush1.msra.mxu0 0.0
        %305 = vmatprep.subr.mxu0 0.0
        %306 = vmatpush1.msra.mxu0 0.0
        %307 = vmatprep.subr.mxu0 0.0
        %308 = vmatpush1.msra.mxu0 0.0
        %309 = vmatprep.subr.mxu0 0.0
        %310 = vmatpush1.msra.mxu0 0.0
        %311 = vmatprep.subr.mxu0 0.0
        %312 = vmatpush1.msra.mxu0 0.0
        %313 = vmatprep.subr.mxu0 0.0
        %314 = vmatpush1.msra.mxu0 0.0
        %315 = vmatprep.subr.mxu0 0.0
        %316 = vmatpush1.msra.mxu0 0.0
        %317 = vmatprep.subr.mxu0 0.0
        %318 = vmatpush1.msra.mxu0 0.0
        %319 = vmatprep.mubr.f32.mxu0 0.0
        %320 = vmatmul.mubr.f32.gmra.mrb[0].mxu0 %v231
        %v321 = vpop.f32.mrb[0].mxu0
        %v322 = vadd.f32 %v253, %v321
        %v323 = vpop.f32.mrb[0].mxu0
        %324 = vdwg.mxu0
        %v325 = vxor.u32 %v322, 2147483648
        %v326 = vmul.f32 %v325, 1.442695
        %v327 = vpow.pop %v326
        %v328 = vadd.f32 %v327, 1.0
        %v329 = vrcp.pop %v328
        %v330 = vmul.f32 1.0, %v329
        %331 = vst [vmem:[#allocation2] sm:$0xff] %v330
        %p332 = scmp.eq.s32.totalorder %s23, 2
        // Predicated region
        $region41: #{dbn_forward_fused.1} parent=31 // pred_check
          %p333 = pneg %p332
        $region42: #{dbn_forward_fused.1} parent=31 // pred_check_branch
          %335 = sbr.rel (%p333) target = $region44
        $region43: #{dbn_forward_fused.1} parent=31 // pred_region
          %v336 = vld [vmem:[#allocation2] sm:$0xff]
          %337 = vst [vmem:[#allocation6] sm:$0xff] %v336
        $region44: #{dbn_forward_fused.1} parent=31 // pred_fallthru
          _
        // Predicated region
        $region45: #{dbn_forward_fused.1} parent=31 // pred_check
          %p338 = pneg %p126
        $region46: #{dbn_forward_fused.1} parent=31 // pred_check_branch
          %340 = sbr.rel (%p338) target = $region48
        $region47: #{dbn_forward_fused.1} parent=31 // pred_region
          %s342 = ssub.s32 128, 128
          %343 = vsyncadd [#allocation5], %s342
          %s344 = smul.addr %s22, 128
          %s345 = scalar_lea.hbm %s3, %s344
          %s347 = sshll.u32 [#allocation6], 4
          %s348 = int_to_ptr.vmem [resolvable:$true] %s347
          %350 = dma.vmem_to_hbm [thread:$0]  %s348, 128, %s345, [#allocation5]
        $region48: #{dbn_forward_fused.1} parent=31 // pred_fallthru
          _
        // Predicated region
        $region49: #{dbn_forward_fused.1} parent=31 // pred_check
          %p351 = pneg %p126
        $region50: #{dbn_forward_fused.1} parent=31 // pred_check_branch
          %353 = sbr.rel (%p351) target = $region52
        $region51: #{dbn_forward_fused.1} parent=31 // pred_region
          %354 = dma.done [#allocation5], 128
        $region52: #{dbn_forward_fused.1} parent=31 // pred_fallthru
          _
      $region32: #{dbn_forward_fused.1} parent=5 // pred_fallthru
        _
      %p355 = scmp.le.s32.totalorder 2, %s13
      // Predicated region
      $region53: #{dbn_forward_fused.1} parent=5 // pred_check
        %p356 = pneg %p355
      $region54: #{dbn_forward_fused.1} parent=5 // pred_check_branch
        %358 = sbr.rel (%p356) target = $region56
      $region55: #{dbn_forward_fused.1} parent=5 // pred_region
        %s359 = ssub.s32 %s13, 2
      $region56: #{dbn_forward_fused.1} parent=5 // pred_fallthru
        _
    $region6: #{dbn_forward_fused.1} parent=1 // loop_footer
      %s17 = sadd.s32 1, %s13
    $region7: #{dbn_forward_fused.1} parent=1 // loop_footer_branch
      %12 = sbr.rel target = $region3
    $region8: #{dbn_forward_fused.1} parent=1 // loop_exit
      _
    %360 = vsyncpa [#allocation4], 1
    %s361 = scalar_lea.sflag [#allocation4], 1
    %362 = vsyncpa %s361, 1
    %363 = vsyncpa [#allocation5], 1
    %s364 = scalar_lea.sflag [#allocation5], 1
    %365 = vsyncpa %s364, 1

</llo_original>
